<compile_context>
chip_gen: v6e
topology: v6e:2x2x1
jax: 0.10.0
libtpu: 0.0.40
codegen_flags: <defaults>
</compile_context>

<pallas_src>
import math

import jax
import jax.numpy as jnp
from jax.experimental import pallas as pl
from jax.experimental.pallas import tpu as pltpu


def _round_up(x, m):
    return ((x + m - 1) // m) * m


def _emb_gather_kernel(idx_ref, col_ref, table_ref, out_ref):
    """One grid step gathers PACK*BMP token embeddings, lane-dense.

    idx_ref   : VMEM [BMP, PACK]           int32 raw token ids
    col_ref   : VMEM [BMP, V_pad]          resident lane iota (0..V_pad-1 per row)
    table_ref : VMEM [PACK*V_pad, PACK*E]  block-diagonal replicated embedding table
    out_ref   : VMEM [BMP, PACK*E]         PACK*E is a multiple of 128 -> unmasked stores
    """
    pack = idx_ref.shape[1]
    col = col_ref[...]                                     # [BMP, V_pad], DMA'd once

    # Segment-local one-hot: each piece is one vreg-column-aligned 128-lane
    # block, so the concatenate is pure layout placement (no VALU).
    pieces = [
        (idx_ref[:, j:j + 1] == col).astype(table_ref.dtype)      # [BMP, V_pad]
        for j in range(pack)
    ]
    onehot = jnp.concatenate(pieces, axis=1)               # [BMP, PACK*V_pad]

    # Exact gather via MXU: block-diagonal table routes segment j of the
    # contraction to output lanes [j*E, (j+1)*E).
    emb = jnp.dot(onehot, table_ref[...], preferred_element_type=jnp.float32)

    # Dropout: nn.Dropout is identity in eval mode; reproduced as identity.
    # TODO(synk): training-mode dropout would need pltpu.prng_* masking + 1/(1-p) scale.
    out_ref[...] = emb.astype(out_ref.dtype)


def cnn_char_emb_forward(inp_data, emb_table, *, block_m=4096, out_dtype=None):
    """Pallas implementation of CNNCharEmb.forward (the reachable path).

    inp_data : int  [N, T]   (N = seq_len*nbatch, T = token_len)
    emb_table: f32  [V, E]   (nn.Embedding weight)
    out_dtype: output dtype (default: emb_table.dtype; pass jnp.bfloat16 to
               halve the HBM output write on the large-M, bandwidth-bound path)
    returns  : [N, T, E]
    """
    n, t = inp_data.shape
    v, e = emb_table.shape
    m = n * t
    out_dtype = emb_table.dtype if out_dtype is None else out_dtype

    # ---- layout constants ----------------------------------------------------
    pack = 128 // math.gcd(e, 128)            # tokens packed per 128-lane output row
    v_pad = _round_up(v, 128)                 # full-lane one-hot segments
    row_align = 8 * pack                      # keeps bmp a sublane multiple

    # ---- tiling: big tiles, >=2 parallel steps, prefer exact division --------
    m_al = _round_up(m, row_align)
    units = m_al // row_align
    min_steps = 2 if units >= 2 else 1        # v7x: 2 TCs share the "parallel" axis
    natural = max(min_steps, -(-m_al // block_m))

    grid = natural
    blk = _round_up(-(-m_al // natural), row_align)
    for cand in range(natural, natural + 8):  # nudge to an exact divisor if nearby
        if m_al % (cand * row_align) == 0:
            grid, blk = cand, m_al // cand
            break
    m_pad = grid * blk
    bmp = blk // pack

    # ---- operand prep (plain XLA, outside the kernel) --------------------------
    idx_flat = inp_data.reshape(-1).astype(jnp.int32)
    idx_flat = jnp.pad(idx_flat, (0, m_pad - m))            # padded rows sliced off below
    idx2d = idx_flat.reshape(m_pad // pack, pack)           # [p, j] = id of token p*pack+j

    table_pad = jnp.pad(emb_table, ((0, v_pad - v), (0, 0)))
    # Block-diagonal replication (tiny for a char vocab): [pack*V_pad, pack*E].
    table_big = jnp.kron(jnp.eye(pack, dtype=emb_table.dtype), table_pad)
    # Grid-invariant lane iota, resident in VMEM via constant index_map.
    col = jnp.broadcast_to(jnp.arange(v_pad, dtype=jnp.int32)[None, :], (bmp, v_pad))
    # TODO(synk): for a non-toy vocabulary (V_pad >= ~512), replace the one-hot
    # matmul + kron table with a scalar-prefetched DMA row gather.

    out_packed = pl.pallas_call(
        _emb_gather_kernel,
        out_shape=jax.ShapeDtypeStruct((m_pad // pack, pack * e), out_dtype),
        grid_spec=pltpu.PrefetchScalarGridSpec(
            num_scalar_prefetch=0,
            grid=(grid,),
            in_specs=[
                # ids for this tile (lane-sparse but tiny; amortized by blk)
                pl.BlockSpec((bmp, pack), lambda i: (i, 0)),
                # constant index_map -> DMA'd once, resident across all steps
                pl.BlockSpec((bmp, v_pad), lambda i: (0, 0)),
                pl.BlockSpec((pack * v_pad, pack * e), lambda i: (0, 0)),
            ],
            out_specs=pl.BlockSpec((bmp, pack * e), lambda i: (i, 0)),
        ),
        compiler_params=pltpu.CompilerParams(
            dimension_semantics=("parallel",)),
    )(idx2d, col, table_big)

    # Row-major un-pack: row p of out_packed holds tokens pack*p .. pack*p+pack-1.
    # When m_pad == m (the common, row-aligned case) the slice is a no-op and
    # both reshapes are free bitcasts.
    return out_packed.reshape(m_pad, e)[:m].reshape(n, t, e)


if __name__ == "__main__":
    # Small, module-consistent hyperparameters.
    prm = dict(voc_size=64, emb_size=32, hid_size=32,
               char_kmin=1, char_kmax=3, drop_rate=0.0)

    seq_len, nbatch, token_len = 8, 2, 8
    N = seq_len * nbatch                       # 16
    T = token_len                              # 8  -> M = 128 flattened tokens

    key = jax.random.PRNGKey(0)
    k_tab, k_idx = jax.random.split(key)

    # nn.Embedding default init ~ N(0, 1). (Conv/Linear params are dead code in forward.)
    emb_table = jax.random.normal(k_tab, (prm['voc_size'], prm['emb_size']),
                                  dtype=jnp.float32)
    inp_data = jax.random.randint(k_idx, (N, T), 0, prm['voc_size'],
                                  dtype=jnp.int32)

    out = cnn_char_emb_forward(inp_data, emb_table)
    out = jax.block_until_ready(out)

    # Pure-JAX reference: embedding lookup (dropout identity in eval).
    ref = jnp.take(emb_table, inp_data, axis=0)
    assert out.shape == (N, T, prm['emb_size'])
    assert jnp.allclose(out, ref, atol=1e-5, rtol=1e-5)

    print("KERNEL_OK")
</pallas_src>

<mosaic_0001>
module attributes {stable_mosaic.version = 11 : i64} {
  func.func @_emb_gather_kernel(%arg0: i32, %arg1: memref<16x4xi32, #tpu.memory_space<vmem>>, %arg2: memref<16x128xi32, #tpu.memory_space<vmem>>, %arg3: memref<512x128xf32, #tpu.memory_space<vmem>>, %arg4: memref<16x128xf32, #tpu.memory_space<vmem>>) attributes {dimension_semantics = [#tpu.dimension_semantics<parallel>], iteration_bounds = array<i64: 2>, scalar_prefetch = 0 : i64, scratch_operands = 0 : i64, tpu.core_type = #tpu.core_type<tc>, window_params = [{transform_indices = @transform_0, window_bounds = array<i64: 16, 4>}, {pipeline_mode = #tpu.pipeline_mode<synchronous>, transform_indices = @transform_1, window_bounds = array<i64: 16, 128>}, {pipeline_mode = #tpu.pipeline_mode<synchronous>, transform_indices = @transform_2, window_bounds = array<i64: 512, 128>}, {transform_indices = @transform_3, window_bounds = array<i64: 16, 128>}]} {
    %c0 = arith.constant 0 : index
    %c0_0 = arith.constant 0 : index
    %0 = vector.load %arg2[%c0, %c0_0] : memref<16x128xi32, #tpu.memory_space<vmem>>, vector<16x128xi32>
    %c0_1 = arith.constant 0 : index
    %c0_2 = arith.constant 0 : index
    %1 = vector.load %arg1[%c0_1, %c0_2] : memref<16x4xi32, #tpu.memory_space<vmem>>, vector<16x1xi32>
    %2 = vector.broadcast %1 : vector<16x1xi32> to vector<16x128xi32>
    %3 = arith.cmpi eq, %2, %0 : vector<16x128xi32>
    %4 = arith.extui %3 : vector<16x128xi1> to vector<16x128xi32>
    %5 = arith.sitofp %4 : vector<16x128xi32> to vector<16x128xf32>
    %c0_3 = arith.constant 0 : index
    %c1 = arith.constant 1 : index
    %6 = vector.load %arg1[%c0_3, %c1] : memref<16x4xi32, #tpu.memory_space<vmem>>, vector<16x1xi32>
    %7 = vector.broadcast %6 : vector<16x1xi32> to vector<16x128xi32>
    %8 = arith.cmpi eq, %7, %0 : vector<16x128xi32>
    %9 = arith.extui %8 : vector<16x128xi1> to vector<16x128xi32>
    %10 = arith.sitofp %9 : vector<16x128xi32> to vector<16x128xf32>
    %c0_4 = arith.constant 0 : index
    %c2 = arith.constant 2 : index
    %11 = vector.load %arg1[%c0_4, %c2] : memref<16x4xi32, #tpu.memory_space<vmem>>, vector<16x1xi32>
    %12 = vector.broadcast %11 : vector<16x1xi32> to vector<16x128xi32>
    %13 = arith.cmpi eq, %12, %0 : vector<16x128xi32>
    %14 = arith.extui %13 : vector<16x128xi1> to vector<16x128xi32>
    %15 = arith.sitofp %14 : vector<16x128xi32> to vector<16x128xf32>
    %c0_5 = arith.constant 0 : index
    %c3 = arith.constant 3 : index
    %16 = vector.load %arg1[%c0_5, %c3] : memref<16x4xi32, #tpu.memory_space<vmem>>, vector<16x1xi32>
    %17 = vector.broadcast %16 : vector<16x1xi32> to vector<16x128xi32>
    %18 = arith.cmpi eq, %17, %0 : vector<16x128xi32>
    %19 = arith.extui %18 : vector<16x128xi1> to vector<16x128xi32>
    %20 = arith.sitofp %19 : vector<16x128xi32> to vector<16x128xf32>
    %21 = tpu.concatenate %5, %10, %15, %20 in 1 : vector<16x128xf32>, vector<16x128xf32>, vector<16x128xf32>, vector<16x128xf32> -> vector<16x512xf32>
    %c0_6 = arith.constant 0 : index
    %c0_7 = arith.constant 0 : index
    %22 = vector.load %arg3[%c0_6, %c0_7] : memref<512x128xf32, #tpu.memory_space<vmem>>, vector<512x128xf32>
    %cst = arith.constant dense<0.000000e+00> : vector<16x128xf32>
    %23 = tpu.matmul %21, %22, %cst {dimension_numbers = #tpu.dot_dimension_numbers<[1], [0], [0], [1], [0, 0, 1, 1], [], []>} : vector<16x512xf32>, vector<512x128xf32>, vector<16x128xf32> -> vector<16x128xf32>
    %c0_8 = arith.constant 0 : index
    %c0_9 = arith.constant 0 : index
    %24 = vector.load %arg4[%c0_8, %c0_9] : memref<16x128xf32, #tpu.memory_space<vmem>>, vector<16x128xf32>
    tpu.vector_store %arg4[%c0_8, %c0_9], %23 {strides = array<i32>} : memref<16x128xf32, #tpu.memory_space<vmem>>, vector<16x128xf32>,
    return
  }
  func.func @transform_0(%arg0: i32) -> (i32, i32) {
    %c0_i32 = arith.constant 0 : i32
    %c0_i32_0 = arith.constant 0 : i32
    return %arg0, %c0_i32 : i32, i32
  }
  func.func @transform_1(%arg0: i32) -> (i32, i32) {
    %c0_i32 = arith.constant 0 : i32
    %c0_i32_0 = arith.constant 0 : i32
    %c0_i32_1 = arith.constant 0 : i32
    return %c0_i32, %c0_i32_0 : i32, i32
  }
  func.func @transform_2(%arg0: i32) -> (i32, i32) {
    %c0_i32 = arith.constant 0 : i32
    %c0_i32_0 = arith.constant 0 : i32
    %c0_i32_1 = arith.constant 0 : i32
    return %c0_i32, %c0_i32_0 : i32, i32
  }
  func.func @transform_3(%arg0: i32) -> (i32, i32) {
    %c0_i32 = arith.constant 0 : i32
    %c0_i32_0 = arith.constant 0 : i32
    return %arg0, %c0_i32 : i32, i32
  }
}

</mosaic_0001>

<llo_original>
// kernel: tpu_custom_call.1
$region0: #{tpu_custom_call.1}
  #allocation0 [shape = 'u32[]', space=smem, size = 0x4, offset = 0x4, fixed_abs, tag = 'smem constant byte address 0x4 - core index']
  #allocation1 [shape = 'u32[144,128]{1,0:T(1,128)}', space=vmem, size = 0x12000, scoped, tag = 'internal scratch']
  %s0 = inlined_call_operand.vmem [shape: s32[32,4], index: 0, kind: input, shape index: {}]
  %s1 = inlined_call_operand.vmem [shape: s32[16,128], index: 1, kind: input, shape index: {}]
  %s2 = inlined_call_operand.hbm [shape: f32[512,128], index: 2, kind: input, shape index: {}]
  %s3 = inlined_call_operand.hbm [shape: f32[32,128], index: 3, kind: output, shape index: {}]
  %s4 = sld [smem:[#allocation0]]
  $region49: #{tpu_custom_call.1} parent=0
    _
  %s6 = ssub.s32 1, %s4
  %s7 = scalar_select 0, %s6, %s4
  $region1: #{tpu_custom_call.1} parent=0
    #allocation2 [shape = 'u8[262144]{0}', space=vmem, size = 0x40000, scoped, tag = 'input window, operand 2, single buffered']
    #allocation3 [shape = 's32[2]{0}', space=sflag, size = 0x8, scoped, tag = 'scoped memory for tpu_custom_call.1']
    #allocation4 [shape = 's32[2]{0}', space=sflag, size = 0x8, scoped, tag = 'scoped memory for tpu_custom_call.1']
    #allocation5 [shape = 'u8[16384]{0}', space=vmem, size = 0x4000, scoped, tag = 'output window, operand 0']
    %8 = vsyncpa [#allocation3], 0
    %9 = vsyncpa [#allocation4], 0
    %s10 = scalar_lea.sflag [#allocation4], 1
    %11 = vsyncpa %s10, 0
    loop: start=0, step=1, limit=4
    $region2: #{tpu_custom_call.1} parent=1 // loop_pre_header
      _
    $region3: #{tpu_custom_call.1} parent=1 // loop_header
      %s13 = sphi 0, %s17
      %p14 = scmp.ge.s32.totalorder %s13, 4
      %s23 = sphi 0, %s25
      %s26 = sphi 0, %s23
      %s27 = sphi 0, %s26
      %s43 = sphi 0, %s27
      %s47 = sphi 0, %s47
      %s49 = sphi 0, %s47
      %s50 = sphi 0, %s49
      %s64 = sphi 0, %s50
      %s68 = sphi 0, %s68
      %s70 = sphi 0, %s68
      %s71 = sphi 0, %s70
      %s85 = sphi 0, %s71
      %s91 = sphi 0, %s93
      %s94 = sphi 0, %s91
      %s95 = sphi 0, %s94
      %s111 = sphi 0, %s95
    $region4: #{tpu_custom_call.1} parent=1 // loop_header_branch
      %16 = sbr.rel (%p14) target = $region8
    $region5: #{tpu_custom_call.1} parent=1 // loop_body
      %s18 = ssub.s32 %s13, 1
      %s19 = ssub.s32 %s13, 2
      %s20 = sadd.s32 %s13, 1
      %s21 = ssub.s32 %s13, %s20
      %p22 = scmp.eq.s32.totalorder %s21, 0
      %s24 = sadd.s32 %s23, 1
      %s25 = scalar_select %p22, %s23, %s24
      %p28 = pneg %p22
      %p29 = scmp.eq.s32.totalorder %s13, 1
      %p30 = por %p28, %p29
      %p31 = scmp.ne.s32.totalorder %s23, %s26
      %p32 = scmp.eq.s32.totalorder %s13, 0
      %p33 = por %p31, %p32
      %p34 = scmp.ne.s32.totalorder %s23, %s26
      %p35 = scmp.eq.s32.totalorder %s18, 1
      %p36 = por %p34, %p35
      %p37 = scmp.ne.s32.totalorder %s26, %s27
      %p38 = scmp.eq.s32.totalorder %s18, 0
      %p39 = por %p37, %p38
      %p40 = scmp.ne.s32.totalorder %s26, %s27
      %p41 = scmp.eq.s32.totalorder %s19, 1
      %p42 = por %p40, %p41
      %p44 = scmp.ne.s32.totalorder %s27, %s43
      %p45 = scmp.eq.s32.totalorder %s19, 0
      %p46 = por %p44, %p45
      %s48 = sadd.s32 %s47, 1
      %p51 = scmp.eq.s32.totalorder %s13, 1
      %p52 = scmp.ne.s32.totalorder %s47, %s49
      %p53 = scmp.eq.s32.totalorder %s13, 0
      %p54 = por %p52, %p53
      %p55 = scmp.ne.s32.totalorder %s47, %s49
      %p56 = scmp.eq.s32.totalorder %s18, 1
      %p57 = por %p55, %p56
      %p58 = scmp.ne.s32.totalorder %s49, %s50
      %p59 = scmp.eq.s32.totalorder %s18, 0
      %p60 = por %p58, %p59
      %p61 = scmp.ne.s32.totalorder %s49, %s50
      %p62 = scmp.eq.s32.totalorder %s19, 1
      %p63 = por %p61, %p62
      %p65 = scmp.ne.s32.totalorder %s50, %s64
      %p66 = scmp.eq.s32.totalorder %s19, 0
      %p67 = por %p65, %p66
      %s69 = sadd.s32 %s68, 1
      %p72 = scmp.eq.s32.totalorder %s13, 1
      %p73 = scmp.ne.s32.totalorder %s68, %s70
      %p74 = scmp.eq.s32.totalorder %s13, 0
      %p75 = por %p73, %p74
      %p76 = scmp.ne.s32.totalorder %s68, %s70
      %p77 = scmp.eq.s32.totalorder %s18, 1
      %p78 = por %p76, %p77
      %p79 = scmp.ne.s32.totalorder %s70, %s71
      %p80 = scmp.eq.s32.totalorder %s18, 0
      %p81 = por %p79, %p80
      %p82 = scmp.ne.s32.totalorder %s70, %s71
      %p83 = scmp.eq.s32.totalorder %s19, 1
      %p84 = por %p82, %p83
      %p86 = scmp.ne.s32.totalorder %s71, %s85
      %p87 = scmp.eq.s32.totalorder %s19, 0
      %p88 = por %p86, %p87
      %s89 = ssub.s32 %s13, %s20
      %p90 = scmp.eq.s32.totalorder %s89, 0
      %s92 = sadd.s32 %s91, 1
      %s93 = scalar_select %p90, %s91, %s92
      %p96 = pneg %p90
      %p97 = scmp.eq.s32.totalorder %s13, 1
      %p98 = por %p96, %p97
      %p99 = scmp.ne.s32.totalorder %s91, %s94
      %p100 = scmp.eq.s32.totalorder %s13, 0
      %p101 = por %p99, %p100
      %p102 = scmp.ne.s32.totalorder %s91, %s94
      %p103 = scmp.eq.s32.totalorder %s18, 1
      %p104 = por %p102, %p103
      %p105 = scmp.ne.s32.totalorder %s94, %s95
      %p106 = scmp.eq.s32.totalorder %s18, 0
      %p107 = por %p105, %p106
      %p108 = scmp.ne.s32.totalorder %s94, %s95
      %p109 = scmp.eq.s32.totalorder %s19, 1
      %p110 = por %p108, %p109
      %p112 = scmp.ne.s32.totalorder %s95, %s111
      %p113 = scmp.eq.s32.totalorder %s19, 0
      %p114 = por %p112, %p113
      %p115 = scmp.le.s32.totalorder 1, %s13
      %p116 = scmp.lt.s32.totalorder %s13, 3
      %p117 = pnand %p115, %p116
      %p118 = pneg %p117
      // Predicated region
      $region9: #{tpu_custom_call.1} parent=5 // pred_check
        _
      $region10: #{tpu_custom_call.1} parent=5 // pred_check_branch
        %120 = sbr.rel (%p117) target = $region12
      $region11: #{tpu_custom_call.1} parent=5 // pred_region
        %s121 = ssub.s32 %s13, 1
        // Predicated region
        $region13: #{tpu_custom_call.1} parent=11 // pred_check
          %p122 = pneg %p60
        $region14: #{tpu_custom_call.1} parent=11 // pred_check_branch
          %124 = sbr.rel (%p122) target = $region16
        $region15: #{tpu_custom_call.1} parent=11 // pred_region
          _
        $region16: #{tpu_custom_call.1} parent=11 // pred_fallthru
          _
        // Predicated region
        $region17: #{tpu_custom_call.1} parent=11 // pred_check
          %p125 = pneg %p81
        $region18: #{tpu_custom_call.1} parent=11 // pred_check_branch
          %127 = sbr.rel (%p125) target = $region20
        $region19: #{tpu_custom_call.1} parent=11 // pred_region
          %s129 = ssub.s32 8192, 8192
          %130 = vsyncadd [#allocation3], %s129
          %s131 = sshll.u32 [#allocation2], 4
          %s132 = int_to_ptr.vmem [resolvable:$true] %s131
          %137 = dma.hbm_to_vmem [thread:$0]  %s2, 8192, %s132, [#allocation3], 128, 128, 8
        $region20: #{tpu_custom_call.1} parent=11 // pred_fallthru
          _
      $region12: #{tpu_custom_call.1} parent=5 // pred_fallthru
        _
      %p138 = scmp.lt.s32.totalorder %s13, 2
      // Predicated region
      $region21: #{tpu_custom_call.1} parent=5 // pred_check
        %p139 = pneg %p138
      $region22: #{tpu_custom_call.1} parent=5 // pred_check_branch
        %141 = sbr.rel (%p139) target = $region24
      $region23: #{tpu_custom_call.1} parent=5 // pred_region
        // Predicated region
        $region25: #{tpu_custom_call.1} parent=23 // pred_check
          %p142 = pneg %p33
        $region26: #{tpu_custom_call.1} parent=23 // pred_check_branch
          %144 = sbr.rel (%p142) target = $region28
        $region27: #{tpu_custom_call.1} parent=23 // pred_region
          %s145 = smul.u32 2, %s13
          %p146 = scmp.lt.s32.totalorder %s145, 3
          %s147 = scalar_select %p146, %s145, 3
          %s148 = smul.addr %s147, 8
          %s149 = scalar_lea.vmem %s0, %s148
          %s150 = smul.u32 2, %s13
        $region28: #{tpu_custom_call.1} parent=23 // pred_fallthru
          _
      $region24: #{tpu_custom_call.1} parent=5 // pred_fallthru
        _
      %p151 = scmp.le.s32.totalorder 1, %s13
      %p152 = scmp.lt.s32.totalorder %s13, 3
      %p153 = pnand %p151, %p152
      %p154 = pneg %p153
      // Predicated region
      $region29: #{tpu_custom_call.1} parent=5 // pred_check
        _
      $region30: #{tpu_custom_call.1} parent=5 // pred_check_branch
        %156 = sbr.rel (%p153) target = $region32
      $region31: #{tpu_custom_call.1} parent=5 // pred_region
        %s157 = ssub.s32 %s13, 1
        // Predicated region
        $region33: #{tpu_custom_call.1} parent=31 // pred_check
          %p158 = pneg %p81
        $region34: #{tpu_custom_call.1} parent=31 // pred_check_branch
          %160 = sbr.rel (%p158) target = $region36
        $region35: #{tpu_custom_call.1} parent=31 // pred_region
          %161 = dma.done [#allocation3], 8192
        $region36: #{tpu_custom_call.1} parent=31 // pred_fallthru
          _
        %s162 = smul.u32 2, %s18
        %p163 = scmp.lt.s32.totalorder %s162, 3
        %s164 = scalar_select %p163, %s162, 3
        %s165 = smul.addr %s164, 8
        %s166 = scalar_lea.vmem %s0, %s165
        %p167 = pneg %p39
        %p168 = pneg %p36
        %p169 = pneg %p60
        %p170 = pneg %p57
        %p171 = pneg %p81
        %p172 = pneg %p78
        %p173 = pneg %p107
        %p174 = pneg %p104
        %s175 = sand.u32 %s94, 1
        %s176 = scalar_lea.sflag [#allocation4], %s175
        %s177 = sand.u32 %s94, 1
        %s178 = smul.addr %s177, 16
        %s179 = scalar_lea.vmem [#allocation5], %s178
        %s180 = smul.u32 2, %s18
        %p181 = scmp.lt.s32.totalorder %s180, 3
        %s182 = scalar_select %p181, %s180, 3
        %s183 = smul.addr %s182, 8
        %s184 = scalar_lea.vmem %s0, %s183
        %s185 = smul.u32 2, %s18
        %s186 = smul.u32 2, %s18
        %v187 = vld [vmem:[%s1] sm:$0xff]
        %v188 = vld [vmem:[%s1 + $0x8] sm:$0xff]
        %v189 = vld [vmem:[%s184] sm:$0xff]
        %v190 = vld [vmem:[%s184 + $0x8] sm:$0xff]
        %191 = vset.pattern.permute.xlu0 0
        %192 = vperm.xlu0 %191, %v189
        %v193 = vpop.permute.xlu0 %192
        %194 = vset.pattern.permute.xlu0 0
        %195 = vperm.xlu0 %194, %v190
        %v196 = vpop.permute.xlu0 %195
        %vm197 = vcmp.eq.s32.totalorder %v193, %v187
        %vm198 = vcmp.eq.s32.totalorder %v196, %v188
        %v199 = vsel %vm197, 1, 0
        %v200 = vsel %vm198, 1, 0
        %v201 = vcvt.s32.f32 %v199
        %v202 = vcvt.s32.f32 %v200
        %203 = vset.pattern.permute.xlu0 1
        %204 = vperm.xlu0 %203, %v189
        %v205 = vpop.permute.xlu0 %204
        %206 = vset.pattern.permute.xlu0 1
        %207 = vperm.xlu0 %206, %v190
        %v208 = vpop.permute.xlu0 %207
        %vm209 = vcmp.eq.s32.totalorder %v205, %v187
        %vm210 = vcmp.eq.s32.totalorder %v208, %v188
        %v211 = vsel %vm209, 1, 0
        %v212 = vsel %vm210, 1, 0
        %v213 = vcvt.s32.f32 %v211
        %v214 = vcvt.s32.f32 %v212
        %215 = vset.pattern.permute.xlu0 2
        %216 = vperm.xlu0 %215, %v189
        %v217 = vpop.permute.xlu0 %216
        %218 = vset.pattern.permute.xlu0 2
        %219 = vperm.xlu0 %218, %v190
        %v220 = vpop.permute.xlu0 %219
        %vm221 = vcmp.eq.s32.totalorder %v217, %v187
        %vm222 = vcmp.eq.s32.totalorder %v220, %v188
        %v223 = vsel %vm221, 1, 0
        %v224 = vsel %vm222, 1, 0
        %v225 = vcvt.s32.f32 %v223
        %v226 = vcvt.s32.f32 %v224
        %227 = vset.pattern.permute.xlu0 3
        %228 = vperm.xlu0 %227, %v189
        %v229 = vpop.permute.xlu0 %228
        %230 = vset.pattern.permute.xlu0 3
        %231 = vperm.xlu0 %230, %v190
        %v232 = vpop.permute.xlu0 %231
        %vm233 = vcmp.eq.s32.totalorder %v229, %v187
        %vm234 = vcmp.eq.s32.totalorder %v232, %v188
        %v235 = vsel %vm233, 1, 0
        %v236 = vsel %vm234, 1, 0
        %v237 = vcvt.s32.f32 %v235
        %v238 = vcvt.s32.f32 %v236
        %v239 = vld [vmem:[#allocation2] sm:$0xff]
        %v240 = vld [vmem:[#allocation2 + $0x8] sm:$0xff]
        %v241 = vld [vmem:[#allocation2 + $0x10] sm:$0xff]
        %v242 = vld [vmem:[#allocation2 + $0x18] sm:$0xff]
        %v243 = vld [vmem:[#allocation2 + $0x20] sm:$0xff]
        %v244 = vld [vmem:[#allocation2 + $0x28] sm:$0xff]
        %v245 = vld [vmem:[#allocation2 + $0x30] sm:$0xff]
        %v246 = vld [vmem:[#allocation2 + $0x38] sm:$0xff]
        %v247 = vld [vmem:[#allocation2 + $0x40] sm:$0xff]
        %v248 = vld [vmem:[#allocation2 + $0x48] sm:$0xff]
        %v249 = vld [vmem:[#allocation2 + $0x50] sm:$0xff]
        %v250 = vld [vmem:[#allocation2 + $0x58] sm:$0xff]
        %v251 = vld [vmem:[#allocation2 + $0x60] sm:$0xff]
        %v252 = vld [vmem:[#allocation2 + $0x68] sm:$0xff]
        %v253 = vld [vmem:[#allocation2 + $0x70] sm:$0xff]
        %v254 = vld [vmem:[#allocation2 + $0x78] sm:$0xff]
        %v255 = vld [vmem:[#allocation2 + $0x80] sm:$0xff]
        %v256 = vld [vmem:[#allocation2 + $0x88] sm:$0xff]
        %v257 = vld [vmem:[#allocation2 + $0x90] sm:$0xff]
        %v258 = vld [vmem:[#allocation2 + $0x98] sm:$0xff]
        %v259 = vld [vmem:[#allocation2 + $0xa0] sm:$0xff]
        %v260 = vld [vmem:[#allocation2 + $0xa8] sm:$0xff]
        %v261 = vld [vmem:[#allocation2 + $0xb0] sm:$0xff]
        %v262 = vld [vmem:[#allocation2 + $0xb8] sm:$0xff]
        %v263 = vld [vmem:[#allocation2 + $0xc0] sm:$0xff]
        %v264 = vld [vmem:[#allocation2 + $0xc8] sm:$0xff]
        %v265 = vld [vmem:[#allocation2 + $0xd0] sm:$0xff]
        %v266 = vld [vmem:[#allocation2 + $0xd8] sm:$0xff]
        %v267 = vld [vmem:[#allocation2 + $0xe0] sm:$0xff]
        %v268 = vld [vmem:[#allocation2 + $0xe8] sm:$0xff]
        %v269 = vld [vmem:[#allocation2 + $0xf0] sm:$0xff]
        %v270 = vld [vmem:[#allocation2 + $0xf8] sm:$0xff]
        %v271 = vld [vmem:[#allocation2 + $0x100] sm:$0xff]
        %v272 = vld [vmem:[#allocation2 + $0x108] sm:$0xff]
        %v273 = vld [vmem:[#allocation2 + $0x110] sm:$0xff]
        %v274 = vld [vmem:[#allocation2 + $0x118] sm:$0xff]
        %v275 = vld [vmem:[#allocation2 + $0x120] sm:$0xff]
        %v276 = vld [vmem:[#allocation2 + $0x128] sm:$0xff]
        %v277 = vld [vmem:[#allocation2 + $0x130] sm:$0xff]
        %v278 = vld [vmem:[#allocation2 + $0x138] sm:$0xff]
        %v279 = vld [vmem:[#allocation2 + $0x140] sm:$0xff]
        %v280 = vld [vmem:[#allocation2 + $0x148] sm:$0xff]
        %v281 = vld [vmem:[#allocation2 + $0x150] sm:$0xff]
        %v282 = vld [vmem:[#allocation2 + $0x158] sm:$0xff]
        %v283 = vld [vmem:[#allocation2 + $0x160] sm:$0xff]
        %v284 = vld [vmem:[#allocation2 + $0x168] sm:$0xff]
        %v285 = vld [vmem:[#allocation2 + $0x170] sm:$0xff]
        %v286 = vld [vmem:[#allocation2 + $0x178] sm:$0xff]
        %v287 = vld [vmem:[#allocation2 + $0x180] sm:$0xff]
        %v288 = vld [vmem:[#allocation2 + $0x188] sm:$0xff]
        %v289 = vld [vmem:[#allocation2 + $0x190] sm:$0xff]
        %v290 = vld [vmem:[#allocation2 + $0x198] sm:$0xff]
        %v291 = vld [vmem:[#allocation2 + $0x1a0] sm:$0xff]
        %v292 = vld [vmem:[#allocation2 + $0x1a8] sm:$0xff]
        %v293 = vld [vmem:[#allocation2 + $0x1b0] sm:$0xff]
        %v294 = vld [vmem:[#allocation2 + $0x1b8] sm:$0xff]
        %v295 = vld [vmem:[#allocation2 + $0x1c0] sm:$0xff]
        %v296 = vld [vmem:[#allocation2 + $0x1c8] sm:$0xff]
        %v297 = vld [vmem:[#allocation2 + $0x1d0] sm:$0xff]
        %v298 = vld [vmem:[#allocation2 + $0x1d8] sm:$0xff]
        %v299 = vld [vmem:[#allocation2 + $0x1e0] sm:$0xff]
        %v300 = vld [vmem:[#allocation2 + $0x1e8] sm:$0xff]
        %v301 = vld [vmem:[#allocation2 + $0x1f0] sm:$0xff]
        %v302 = vld [vmem:[#allocation2 + $0x1f8] sm:$0xff]
        %303 = vmatprep.subr.mxu0 0.0
        %304 = vmatpush1.msra.mxu0 %v254
        %305 = vmatprep.subr.mxu0 0.0
        %306 = vmatpush1.msra.mxu0 %v253
        %307 = vmatprep.subr.mxu0 0.0
        %308 = vmatpush1.msra.mxu0 %v252
        %309 = vmatprep.subr.mxu0 0.0
        %310 = vmatpush1.msra.mxu0 %v251
        %311 = vmatprep.subr.mxu0 0.0
        %312 = vmatpush1.msra.mxu0 %v250
        %313 = vmatprep.subr.mxu0 0.0
        %314 = vmatpush1.msra.mxu0 %v249
        %315 = vmatprep.subr.mxu0 0.0
        %316 = vmatpush1.msra.mxu0 %v248
        %317 = vmatprep.subr.mxu0 0.0
        %318 = vmatpush1.msra.mxu0 %v247
        %319 = vmatprep.subr.mxu0 0.0
        %320 = vmatpush1.msra.mxu0 %v246
        %321 = vmatprep.subr.mxu0 0.0
        %322 = vmatpush1.msra.mxu0 %v245
        %323 = vmatprep.subr.mxu0 0.0
        %324 = vmatpush1.msra.mxu0 %v244
        %325 = vmatprep.subr.mxu0 0.0
        %326 = vmatpush1.msra.mxu0 %v243
        %327 = vmatprep.subr.mxu0 0.0
        %328 = vmatpush1.msra.mxu0 %v242
        %329 = vmatprep.subr.mxu0 0.0
        %330 = vmatpush1.msra.mxu0 %v241
        %331 = vmatprep.subr.mxu0 0.0
        %332 = vmatpush1.msra.mxu0 %v240
        %333 = vmatprep.subr.mxu0 0.0
        %334 = vmatpush1.msra.mxu0 %v239
        %335 = vmatprep.subr.mxu0 0.0
        %336 = vmatpush2.msra.mxu0 %v270
        %337 = vmatprep.subr.mxu0 0.0
        %338 = vmatpush2.msra.mxu0 %v269
        %339 = vmatprep.subr.mxu0 0.0
        %340 = vmatpush2.msra.mxu0 %v268
        %341 = vmatprep.subr.mxu0 0.0
        %342 = vmatpush2.msra.mxu0 %v267
        %343 = vmatprep.subr.mxu0 0.0
        %344 = vmatpush2.msra.mxu0 %v266
        %345 = vmatprep.subr.mxu0 0.0
        %346 = vmatpush2.msra.mxu0 %v265
        %347 = vmatprep.subr.mxu0 0.0
        %348 = vmatpush2.msra.mxu0 %v264
        %349 = vmatprep.subr.mxu0 0.0
        %350 = vmatpush2.msra.mxu0 %v263
        %351 = vmatprep.subr.mxu0 0.0
        %352 = vmatpush2.msra.mxu0 %v262
        %353 = vmatprep.subr.mxu0 0.0
        %354 = vmatpush2.msra.mxu0 %v261
        %355 = vmatprep.subr.mxu0 0.0
        %356 = vmatpush2.msra.mxu0 %v260
        %357 = vmatprep.subr.mxu0 0.0
        %358 = vmatpush2.msra.mxu0 %v259
        %359 = vmatprep.subr.mxu0 0.0
        %360 = vmatpush2.msra.mxu0 %v258
        %361 = vmatprep.subr.mxu0 0.0
        %362 = vmatpush2.msra.mxu0 %v257
        %363 = vmatprep.subr.mxu0 0.0
        %364 = vmatpush2.msra.mxu0 %v256
        %365 = vmatprep.subr.mxu0 0.0
        %366 = vmatpush2.msra.mxu0 %v255
        %367 = vmatprep.mubr.f32.mxu0 %v213
        %368 = vmatmul.mubr.f32.gmra.mxu0 %v201
        %v369 = vpop.f32.mrf.mxu0
        %v370 = vadd.f32 0.0, %v369
        %v371 = vpop.f32.mrf.mxu0
        %372 = vmatprep.mubr.f32.mxu0 %v214
        %373 = vmatmul.mubr.f32.gmra.mxu0 %v202
        %v374 = vpop.f32.mrf.mxu0
        %v375 = vadd.f32 0.0, %v374
        %v376 = vpop.f32.mrf.mxu0
        %377 = vdwg.mxu0
        %378 = vmatprep.subr.mxu0 0.0
        %379 = vmatpush1.msra.mxu0 %v286
        %380 = vmatprep.subr.mxu0 0.0
        %381 = vmatpush1.msra.mxu0 %v285
        %382 = vmatprep.subr.mxu0 0.0
        %383 = vmatpush1.msra.mxu0 %v284
        %384 = vmatprep.subr.mxu0 0.0
        %385 = vmatpush1.msra.mxu0 %v283
        %386 = vmatprep.subr.mxu0 0.0
        %387 = vmatpush1.msra.mxu0 %v282
        %388 = vmatprep.subr.mxu0 0.0
        %389 = vmatpush1.msra.mxu0 %v281
        %390 = vmatprep.subr.mxu0 0.0
        %391 = vmatpush1.msra.mxu0 %v280
        %392 = vmatprep.subr.mxu0 0.0
        %393 = vmatpush1.msra.mxu0 %v279
        %394 = vmatprep.subr.mxu0 0.0
        %395 = vmatpush1.msra.mxu0 %v278
        %396 = vmatprep.subr.mxu0 0.0
        %397 = vmatpush1.msra.mxu0 %v277
        %398 = vmatprep.subr.mxu0 0.0
        %399 = vmatpush1.msra.mxu0 %v276
        %400 = vmatprep.subr.mxu0 0.0
        %401 = vmatpush1.msra.mxu0 %v275
        %402 = vmatprep.subr.mxu0 0.0
        %403 = vmatpush1.msra.mxu0 %v274
        %404 = vmatprep.subr.mxu0 0.0
        %405 = vmatpush1.msra.mxu0 %v273
        %406 = vmatprep.subr.mxu0 0.0
        %407 = vmatpush1.msra.mxu0 %v272
        %408 = vmatprep.subr.mxu0 0.0
        %409 = vmatpush1.msra.mxu0 %v271
        %410 = vmatprep.subr.mxu0 0.0
        %411 = vmatpush2.msra.mxu0 %v302
        %412 = vmatprep.subr.mxu0 0.0
        %413 = vmatpush2.msra.mxu0 %v301
        %414 = vmatprep.subr.mxu0 0.0
        %415 = vmatpush2.msra.mxu0 %v300
        %416 = vmatprep.subr.mxu0 0.0
        %417 = vmatpush2.msra.mxu0 %v299
        %418 = vmatprep.subr.mxu0 0.0
        %419 = vmatpush2.msra.mxu0 %v298
        %420 = vmatprep.subr.mxu0 0.0
        %421 = vmatpush2.msra.mxu0 %v297
        %422 = vmatprep.subr.mxu0 0.0
        %423 = vmatpush2.msra.mxu0 %v296
        %424 = vmatprep.subr.mxu0 0.0
        %425 = vmatpush2.msra.mxu0 %v295
        %426 = vmatprep.subr.mxu0 0.0
        %427 = vmatpush2.msra.mxu0 %v294
        %428 = vmatprep.subr.mxu0 0.0
        %429 = vmatpush2.msra.mxu0 %v293
        %430 = vmatprep.subr.mxu0 0.0
        %431 = vmatpush2.msra.mxu0 %v292
        %432 = vmatprep.subr.mxu0 0.0
        %433 = vmatpush2.msra.mxu0 %v291
        %434 = vmatprep.subr.mxu0 0.0
        %435 = vmatpush2.msra.mxu0 %v290
        %436 = vmatprep.subr.mxu0 0.0
        %437 = vmatpush2.msra.mxu0 %v289
        %438 = vmatprep.subr.mxu0 0.0
        %439 = vmatpush2.msra.mxu0 %v288
        %440 = vmatprep.subr.mxu0 0.0
        %441 = vmatpush2.msra.mxu0 %v287
        %442 = vmatprep.mubr.f32.mxu0 %v237
        %443 = vmatmul.mubr.f32.gmra.mxu0 %v225
        %v444 = vpop.f32.mrf.mxu0
        %v445 = vadd.f32 %v370, %v444
        %v446 = vpop.f32.mrf.mxu0
        %447 = vmatprep.mubr.f32.mxu0 %v238
        %448 = vmatmul.mubr.f32.gmra.mxu0 %v226
        %v449 = vpop.f32.mrf.mxu0
        %v450 = vadd.f32 %v375, %v449
        %v451 = vpop.f32.mrf.mxu0
        %452 = vdwg.mxu0
        %453 = vst [vmem:[%s179] sm:$0xff] %v445
        %454 = vst [vmem:[%s179 + $0x8] sm:$0xff] %v450
        %s455 = sand.u32 %s94, 1
        %s456 = scalar_lea.sflag [#allocation4], %s455
        %s457 = sand.u32 %s94, 1
        %s458 = smul.addr %s457, 16
        %s459 = scalar_lea.vmem [#allocation5], %s458
        // Predicated region
        $region37: #{tpu_custom_call.1} parent=31 // pred_check
          %p460 = pneg %p104
        $region38: #{tpu_custom_call.1} parent=31 // pred_check_branch
          %462 = sbr.rel (%p460) target = $region40
        $region39: #{tpu_custom_call.1} parent=31 // pred_region
          %s463 = smul.u32 2, %s18
          %s465 = ssub.s32 256, 256
          %466 = vsyncadd %s456, %s465
          %s467 = smul.addr %s463, 128
          %s468 = scalar_lea.hbm %s3, %s467
          %s469 = sshll.u32 %s459, 4
          %s470 = int_to_ptr.vmem [resolvable:$true] %s469
          %475 = dma.vmem_to_hbm [thread:$0]  %s470, 256, %s468, %s456, 128, 128, 8
        $region40: #{tpu_custom_call.1} parent=31 // pred_fallthru
          _
      $region32: #{tpu_custom_call.1} parent=5 // pred_fallthru
        _
      %p476 = scmp.le.s32.totalorder 2, %s13
      // Predicated region
      $region41: #{tpu_custom_call.1} parent=5 // pred_check
        %p477 = pneg %p476
      $region42: #{tpu_custom_call.1} parent=5 // pred_check_branch
        %479 = sbr.rel (%p477) target = $region44
      $region43: #{tpu_custom_call.1} parent=5 // pred_region
        %s480 = ssub.s32 %s13, 2
        // Predicated region
        $region45: #{tpu_custom_call.1} parent=43 // pred_check
          %p481 = pneg %p110
        $region46: #{tpu_custom_call.1} parent=43 // pred_check_branch
          %483 = sbr.rel (%p481) target = $region48
        $region47: #{tpu_custom_call.1} parent=43 // pred_region
          %s484 = sand.u32 %s95, 1
          %s485 = scalar_lea.sflag [#allocation4], %s484
          %s486 = sand.u32 %s95, 1
          %s487 = smul.addr %s486, 16
          %s488 = scalar_lea.vmem [#allocation5], %s487
          %489 = dma.done %s485, 256
        $region48: #{tpu_custom_call.1} parent=43 // pred_fallthru
          _
      $region44: #{tpu_custom_call.1} parent=5 // pred_fallthru
        _
    $region6: #{tpu_custom_call.1} parent=1 // loop_footer
      %s17 = sadd.s32 1, %s13
    $region7: #{tpu_custom_call.1} parent=1 // loop_footer_branch
      %12 = sbr.rel target = $region3
    $region8: #{tpu_custom_call.1} parent=1 // loop_exit
      _
    %490 = vsyncpa [#allocation3], 1
    %s491 = scalar_lea.sflag [#allocation3], 1
    %492 = vsyncpa %s491, 1
    %493 = vsyncpa [#allocation4], 1
    %s494 = scalar_lea.sflag [#allocation4], 1
    %495 = vsyncpa %s494, 1

</llo_original>
